<compile_context>
chip_gen: v7x
topology: tpu7x:2x2x1
jax: 0.10.0
libtpu: 0.0.40
codegen_flags: <defaults>
</compile_context>

<pallas_src>
import functools

import jax
import jax.numpy as jnp
from jax import lax
from jax.experimental import pallas as pl
from jax.experimental.pallas import tpu as pltpu

MAX_LENGTH = 10


def _attn_fused_kernel(v_ref, enc_ref, w_ref, ctx_ref, *, mxu_dtype):
    """Fused scores + softmax + context for one row-block of queries.

    v_ref   : (TB, H)  query with the Linear folded in (v = hidden @ W)
    enc_ref : (S,  H)  encoder outputs (seq-first, squeezed)
    w_ref   : (TB, S)  out: softmax attention weights
    ctx_ref : (TB, H)  out: context = weights @ enc
    """
    v = v_ref[...].astype(mxu_dtype)
    enc = enc_ref[...].astype(mxu_dtype)

    # scores[b, i] = v[b] . enc[i]  (contract H; f32 accumulate on the MXU).
    scores = lax.dot_general(
        v, enc,
        dimension_numbers=(((1,), (1,)), ((), ())),
        preferred_element_type=jnp.float32)

    # Numerically-stable softmax over the sequence axis, entirely in f32.
    m = jnp.max(scores, axis=-1, keepdims=True)
    p = jnp.exp(scores - m)
    inv = pl.reciprocal(jnp.sum(p, axis=-1, keepdims=True), approx=True)
    weights = p * inv
    w_ref[...] = weights.astype(w_ref.dtype)

    # Fused downstream context: (TB, S) @ (S, H), canonical MXU layout.
    ctx = lax.dot_general(
        weights.astype(mxu_dtype), enc,
        dimension_numbers=(((1,), (0,)), ((), ())),
        preferred_element_type=jnp.float32)
    ctx_ref[...] = ctx.astype(ctx_ref.dtype)


def attn_weights_and_context(v, enc, *, mxu_dtype=None, block_b=64):
    """v: (B, H) = hidden @ W ; enc: (S, H).

    Returns (attention weights (B, S), context (B, H))."""
    B, H = v.shape
    S, He = enc.shape
    assert He == H
    if mxu_dtype is None:
        mxu_dtype = v.dtype          # caller's native dtype feeds the MXU
    out_dtype = v.dtype

    # Row-block the batch on a 1-D "parallel" grid (uses both TCs on v7x).
    # Keep the (8,128) sublane rule: tb must divide B and be a multiple of 8,
    # otherwise fall back to a single full-B block.
    if B > block_b and block_b % 8 == 0 and B % block_b == 0:
        tb = block_b
    else:
        tb = B
    grid = (B // tb,)

    kernel = functools.partial(_attn_fused_kernel, mxu_dtype=mxu_dtype)
    return pl.pallas_call(
        kernel,
        out_shape=(jax.ShapeDtypeStruct((B, S), out_dtype),
                   jax.ShapeDtypeStruct((B, H), out_dtype)),
        grid=grid,
        in_specs=[pl.BlockSpec((tb, H), lambda i: (i, 0)),
                  pl.BlockSpec((S, H), lambda i: (0, 0))],
        out_specs=(pl.BlockSpec((tb, S), lambda i: (i, 0)),
                   pl.BlockSpec((tb, H), lambda i: (i, 0))),
        compiler_params=pltpu.CompilerParams(
            dimension_semantics=("parallel",)),
    )(v, enc)


def attn_forward(hidden, encoder_outputs, w, b=None):
    """Module-equivalent forward (method='general').

    hidden: (1, H); encoder_outputs: (S, 1, H); w: (H, H) nn.Linear weight
    ((out, in) layout); b: (H,) bias -- unused because hidden.b is constant
    over the sequence and softmax is shift-invariant (post-softmax output only).
    Returns attention weights of shape (1, 1, S), matching the PyTorch module.
    """
    del b  # cancels in the softmax
    S, _, H = encoder_outputs.shape
    enc = encoder_outputs.reshape(S, H)
    # Fold the Linear into the query in plain XLA: no HxH weight DMA per step.
    v = hidden.reshape(1, H) @ w                 # (1, H); score_i = v . enc_i
    weights, _ctx = attn_weights_and_context(v, enc)
    return weights.reshape(1, 1, S)


def attn_forward_ref(hidden, encoder_outputs, w, b):
    """Pure-JAX reference of the PyTorch forward (method='general'), with bias."""
    S, _, H = encoder_outputs.shape
    enc = encoder_outputs.reshape(S, H)
    energy = enc @ w.T + b                 # (S, H)
    scores = energy @ hidden.reshape(H)    # (S,)
    return jax.nn.softmax(scores).reshape(1, 1, S)


if __name__ == "__main__":
    hidden_size = 32   # H
    seq_len = 8        # S (<= MAX_LENGTH)

    key = jax.random.PRNGKey(0)
    k_h, k_e, k_w, k_b, k_hb = jax.random.split(key, 5)

    # nn.Linear(hidden_size, hidden_size)-shaped parameters.
    bound = 1.0 / (hidden_size ** 0.5)
    w = jax.random.uniform(k_w, (hidden_size, hidden_size),
                           minval=-bound, maxval=bound, dtype=jnp.float32)
    b = jax.random.uniform(k_b, (hidden_size,),
                           minval=-bound, maxval=bound, dtype=jnp.float32)

    hidden = jax.random.normal(k_h, (1, hidden_size), dtype=jnp.float32)
    encoder_outputs = jax.random.normal(
        k_e, (seq_len, 1, hidden_size), dtype=jnp.float32)

    # --- module-equivalent path (B = 1) ------------------------------------
    out = attn_forward(hidden, encoder_outputs, w, b)
    jax.block_until_ready(out)
    ref = attn_forward_ref(hidden, encoder_outputs, w, b)
    assert out.shape == (1, 1, seq_len)
    assert jnp.allclose(out, ref, atol=5e-3, rtol=5e-3), (out, ref)
    assert jnp.allclose(jnp.sum(out), 1.0, atol=1e-2)

    # --- batched f32 path (beams x heads x decode positions in one call) ---
    B = 128
    enc2d = encoder_outputs.reshape(seq_len, hidden_size)
    hidden_b = jax.random.normal(k_hb, (B, hidden_size), dtype=jnp.float32)
    v_b = hidden_b @ w                                   # fold Linear in XLA
    w_b, ctx_b = attn_weights_and_context(v_b, enc2d, block_b=64)
    jax.block_until_ready((w_b, ctx_b))

    w_ref_b = jax.vmap(
        lambda h: jax.nn.softmax((enc2d @ w.T + b) @ h))(hidden_b)   # (B, S)
    ctx_ref_b = w_ref_b @ enc2d                                      # (B, H)
    assert w_b.shape == (B, seq_len) and ctx_b.shape == (B, hidden_size)
    assert jnp.allclose(w_b, w_ref_b, atol=5e-3, rtol=5e-3)
    assert jnp.allclose(ctx_b, ctx_ref_b, atol=5e-3, rtol=5e-3)
    assert jnp.allclose(jnp.sum(w_b, axis=-1), jnp.ones((B,)), atol=1e-2)

    # --- batched bf16 path (bf16 MXU operands / DMA, f32 softmax) ----------
    hid16 = hidden_b.astype(jnp.bfloat16)
    enc16 = enc2d.astype(jnp.bfloat16)
    w16 = w.astype(jnp.bfloat16)
    v16 = hid16 @ w16
    w_b16, ctx_b16 = attn_weights_and_context(v16, enc16, block_b=64)
    jax.block_until_ready((w_b16, ctx_b16))

    v32 = v16.astype(jnp.float32)
    e32 = enc16.astype(jnp.float32)
    w_ref16 = jax.nn.softmax(v32 @ e32.T, axis=-1)
    ctx_ref16 = w_ref16 @ e32
    assert jnp.allclose(w_b16.astype(jnp.float32), w_ref16, atol=2e-2, rtol=2e-2)
    assert jnp.allclose(ctx_b16.astype(jnp.float32), ctx_ref16, atol=2e-2, rtol=2e-2)
    assert jnp.allclose(jnp.sum(w_b16.astype(jnp.float32), axis=-1),
                        jnp.ones((B,)), atol=3e-2)

    print("KERNEL_OK")
</pallas_src>

<mosaic_0001>
module attributes {stable_mosaic.version = 11 : i64} {
  func.func @_attn_fused_kernel(%arg0: i32, %arg1: memref<1x32xf32, #tpu.memory_space<vmem>>, %arg2: memref<8x32xf32, #tpu.memory_space<vmem>>, %arg3: memref<1x8xf32, #tpu.memory_space<vmem>>, %arg4: memref<1x32xf32, #tpu.memory_space<vmem>>) attributes {dimension_semantics = [#tpu.dimension_semantics<parallel>], iteration_bounds = array<i64: 1>, scalar_prefetch = 0 : i64, scratch_operands = 0 : i64, tpu.core_type = #tpu.core_type<tc>, window_params = [{transform_indices = @transform_0, window_bounds = array<i64: 1, 32>}, {pipeline_mode = #tpu.pipeline_mode<synchronous>, transform_indices = @transform_1, window_bounds = array<i64: 8, 32>}, {transform_indices = @transform_2, window_bounds = array<i64: 1, 8>}, {transform_indices = @transform_3, window_bounds = array<i64: 1, 32>}]} {
    %c0 = arith.constant 0 : index
    %c0_0 = arith.constant 0 : index
    %0 = vector.load %arg1[%c0, %c0_0] : memref<1x32xf32, #tpu.memory_space<vmem>>, vector<1x32xf32>
    %c0_1 = arith.constant 0 : index
    %c0_2 = arith.constant 0 : index
    %1 = vector.load %arg2[%c0_1, %c0_2] : memref<8x32xf32, #tpu.memory_space<vmem>>, vector<8x32xf32>
    %cst = arith.constant dense<0.000000e+00> : vector<1x8xf32>
    %2 = tpu.matmul %0, %1, %cst {dimension_numbers = #tpu.dot_dimension_numbers<[1], [1], [0], [0], [0, 0, 1, 0], [], []>} : vector<1x32xf32>, vector<8x32xf32>, vector<1x8xf32> -> vector<1x8xf32>
    %cst_3 = arith.constant dense<0xFF800000> : vector<1xf32>
    %3 = vector.multi_reduction <maximumf>, %2, %cst_3 [1] : vector<1x8xf32> to vector<1xf32>
    %4 = vector.shape_cast %3 : vector<1xf32> to vector<1x1xf32>
    %5 = vector.broadcast %4 : vector<1x1xf32> to vector<1x8xf32>
    %6 = arith.subf %2, %5 : vector<1x8xf32>
    %7 = math.exp %6 : vector<1x8xf32>
    %cst_4 = arith.constant dense<0.000000e+00> : vector<1xf32>
    %8 = vector.multi_reduction <add>, %7, %cst_4 [1] : vector<1x8xf32> to vector<1xf32>
    %9 = vector.shape_cast %8 : vector<1xf32> to vector<1x1xf32>
    %10 = tpu.reciprocal %9 {approx = true} : vector<1x1xf32> -> vector<1x1xf32>
    %11 = vector.broadcast %10 : vector<1x1xf32> to vector<1x8xf32>
    %12 = arith.mulf %7, %11 : vector<1x8xf32>
    %c0_5 = arith.constant 0 : index
    %c0_6 = arith.constant 0 : index
    %13 = vector.load %arg3[%c0_5, %c0_6] : memref<1x8xf32, #tpu.memory_space<vmem>>, vector<1x8xf32>
    tpu.vector_store %arg3[%c0_5, %c0_6], %12 {strides = array<i32>} : memref<1x8xf32, #tpu.memory_space<vmem>>, vector<1x8xf32>,
    %cst_7 = arith.constant dense<0.000000e+00> : vector<1x32xf32>
    %14 = tpu.matmul %12, %1, %cst_7 {dimension_numbers = #tpu.dot_dimension_numbers<[1], [0], [0], [1], [0, 0, 1, 1], [], []>} : vector<1x8xf32>, vector<8x32xf32>, vector<1x32xf32> -> vector<1x32xf32>
    %c0_8 = arith.constant 0 : index
    %c0_9 = arith.constant 0 : index
    %15 = vector.load %arg4[%c0_8, %c0_9] : memref<1x32xf32, #tpu.memory_space<vmem>>, vector<1x32xf32>
    tpu.vector_store %arg4[%c0_8, %c0_9], %14 {strides = array<i32>} : memref<1x32xf32, #tpu.memory_space<vmem>>, vector<1x32xf32>,
    return
  }
  func.func @transform_0(%arg0: i32) -> (i32, i32) {
    %c0_i32 = arith.constant 0 : i32
    %c0_i32_0 = arith.constant 0 : i32
    return %arg0, %c0_i32 : i32, i32
  }
  func.func @transform_1(%arg0: i32) -> (i32, i32) {
    %c0_i32 = arith.constant 0 : i32
    %c0_i32_0 = arith.constant 0 : i32
    %c0_i32_1 = arith.constant 0 : i32
    return %c0_i32, %c0_i32_0 : i32, i32
  }
  func.func @transform_2(%arg0: i32) -> (i32, i32) {
    %c0_i32 = arith.constant 0 : i32
    %c0_i32_0 = arith.constant 0 : i32
    return %arg0, %c0_i32 : i32, i32
  }
  func.func @transform_3(%arg0: i32) -> (i32, i32) {
    %c0_i32 = arith.constant 0 : i32
    %c0_i32_0 = arith.constant 0 : i32
    return %arg0, %c0_i32 : i32, i32
  }
}

</mosaic_0001>

<llo_original>
// kernel: tpu_custom_call.1
$region0: #{tpu_custom_call.1}
  #allocation0 [shape = 'u32[]', space=smem, size = 0x4, offset = 0x4, fixed_abs, tag = 'smem constant byte address 0x4 - core index']
  #allocation1 [shape = 'u32[144,128]{1,0:T(1,128)}', space=vmem, size = 0x12000, scoped, tag = 'internal scratch']
  %s0 = inlined_call_operand.hbm [shape: f32[1,32], index: 0, kind: input, shape index: {}]
  %s1 = inlined_call_operand.hbm [shape: f32[8,32], index: 1, kind: input, shape index: {}]
  %s2 = inlined_call_operand.hbm [shape: f32[1,8], index: 2, kind: output, shape index: {0}]
  %s3 = inlined_call_operand.hbm [shape: f32[1,32], index: 3, kind: output, shape index: {1}]
  %4 = xla_tuple %s2, %s3
  %s5 = sld [smem:[#allocation0]]
  $region34: #{tpu_custom_call.1} parent=0
    _
  %s7 = ssub.s32 1, %s5
  %s8 = scalar_select 0, %s7, %s5
  $region1: #{tpu_custom_call.1} parent=0
    #allocation2 [shape = 'u8[512]{0}', space=vmem, size = 0x400, scoped, tag = 'input window, operand 0, single buffered']
    #allocation3 [shape = 's32[1]{0}', space=sflag, size = 0x4, scoped, tag = 'scoped memory for tpu_custom_call.1']
    #allocation4 [shape = 's32[1]{0}', space=sflag, size = 0x4, scoped, tag = 'scoped memory for tpu_custom_call.1']
    #allocation5 [shape = 'u8[4096]{0}', space=vmem, size = 0x1000, scoped, tag = 'input window, operand 1, single buffered']
    #allocation6 [shape = 's32[1]{0}', space=sflag, size = 0x4, scoped, tag = 'scoped memory for tpu_custom_call.1']
    #allocation7 [shape = 'u8[512]{0}', space=vmem, size = 0x400, scoped, tag = 'output window, operand 0, single buffered']
    #allocation8 [shape = 'u8[512]{0}', space=vmem, size = 0x400, scoped, tag = 'output window, operand 1, single buffered']
    #allocation9 [shape = 's32[1]{0}', space=sflag, size = 0x4, scoped, tag = 'scoped memory for tpu_custom_call.1']
    %9 = vsyncpa [#allocation3], 0
    %10 = vsyncpa [#allocation6], 0
    %11 = vsyncpa [#allocation4], 0
    %12 = vsyncpa [#allocation9], 0
    // Predicated region
    $region2: #{tpu_custom_call.1} parent=1 // pred_check
      _
    $region3: #{tpu_custom_call.1} parent=1 // pred_check_branch
      %14 = sbr.rel (0) target = $region5
    $region4: #{tpu_custom_call.1} parent=1 // pred_region
      %s16 = ssub.s32 16, 16
      %17 = vsyncadd [#allocation3], %s16
      %s19 = sshll.u32 [#allocation2], 4
      %s20 = int_to_ptr.vmem [resolvable:$true] %s19
      %22 = dma.hbm_to_vmem [thread:$0]  %s0, 16, %s20, [#allocation3]
    $region5: #{tpu_custom_call.1} parent=1 // pred_fallthru
      _
    // Predicated region
    $region6: #{tpu_custom_call.1} parent=1 // pred_check
      _
    $region7: #{tpu_custom_call.1} parent=1 // pred_check_branch
      %24 = sbr.rel (0) target = $region9
    $region8: #{tpu_custom_call.1} parent=1 // pred_region
      %s26 = ssub.s32 128, 128
      %27 = vsyncadd [#allocation6], %s26
      %s29 = sshll.u32 [#allocation5], 4
      %s30 = int_to_ptr.vmem [resolvable:$true] %s29
      %32 = dma.hbm_to_vmem [thread:$0]  %s1, 128, %s30, [#allocation6]
    $region9: #{tpu_custom_call.1} parent=1 // pred_fallthru
      _
    // Predicated region
    $region10: #{tpu_custom_call.1} parent=1 // pred_check
      _
    $region11: #{tpu_custom_call.1} parent=1 // pred_check_branch
      %34 = sbr.rel (0) target = $region13
    $region12: #{tpu_custom_call.1} parent=1 // pred_region
      %35 = dma.done [#allocation3], 16
    $region13: #{tpu_custom_call.1} parent=1 // pred_fallthru
      _
    // Predicated region
    $region14: #{tpu_custom_call.1} parent=1 // pred_check
      _
    $region15: #{tpu_custom_call.1} parent=1 // pred_check_branch
      %37 = sbr.rel (0) target = $region17
    $region16: #{tpu_custom_call.1} parent=1 // pred_region
      %38 = dma.done [#allocation6], 128
    $region17: #{tpu_custom_call.1} parent=1 // pred_fallthru
      _
    %v39 = vld [vmem:[#allocation2] sm:$0x1]
    %v40 = vld [vmem:[#allocation5] sm:$0xff]
    %vm41 = vcmask 261120
    %v43 = vsel %vm41, %v39, 0
    %v46 = vsel %vm41, %v40, 0
    %48 = vmatprep.subr.mxu0 0.0
    %49 = vmatpush1.xpose.msra.mxu0 %v46
    %50 = vmatprep.subr.mxu0 0.0
    %51 = vmatpush1.xpose.msra.mxu0 0.0
    %52 = vmatprep.subr.mxu0 0.0
    %53 = vmatpush1.xpose.msra.mxu0 0.0
    %54 = vmatprep.subr.mxu0 0.0
    %55 = vmatpush1.xpose.msra.mxu0 0.0
    %56 = vmatprep.subr.mxu0 0.0
    %57 = vmatpush1.xpose.msra.mxu0 0.0
    %58 = vmatprep.subr.mxu0 0.0
    %59 = vmatpush1.xpose.msra.mxu0 0.0
    %60 = vmatprep.subr.mxu0 0.0
    %61 = vmatpush1.xpose.msra.mxu0 0.0
    %62 = vmatprep.subr.mxu0 0.0
    %63 = vmatpush1.xpose.msra.mxu0 0.0
    %64 = vmatprep.subr.mxu0 0.0
    %65 = vmatpush1.xpose.msra.mxu0 0.0
    %66 = vmatprep.subr.mxu0 0.0
    %67 = vmatpush1.xpose.msra.mxu0 0.0
    %68 = vmatprep.subr.mxu0 0.0
    %69 = vmatpush1.xpose.msra.mxu0 0.0
    %70 = vmatprep.subr.mxu0 0.0
    %71 = vmatpush1.xpose.msra.mxu0 0.0
    %72 = vmatprep.subr.mxu0 0.0
    %73 = vmatpush1.xpose.msra.mxu0 0.0
    %74 = vmatprep.subr.mxu0 0.0
    %75 = vmatpush1.xpose.msra.mxu0 0.0
    %76 = vmatprep.subr.mxu0 0.0
    %77 = vmatpush1.xpose.msra.mxu0 0.0
    %78 = vmatprep.subr.mxu0 0.0
    %79 = vmatpush1.xpose.msra.mxu0 0.0
    %80 = vmatprep.subr.mxu0 0.0
    %81 = vmatpush1.xpose.msra.mxu0 0.0
    %82 = vmatprep.subr.mxu0 0.0
    %83 = vmatpush1.xpose.msra.mxu0 0.0
    %84 = vmatprep.subr.mxu0 0.0
    %85 = vmatpush1.xpose.msra.mxu0 0.0
    %86 = vmatprep.subr.mxu0 0.0
    %87 = vmatpush1.xpose.msra.mxu0 0.0
    %88 = vmatprep.subr.mxu0 0.0
    %89 = vmatpush1.xpose.msra.mxu0 0.0
    %90 = vmatprep.subr.mxu0 0.0
    %91 = vmatpush1.xpose.msra.mxu0 0.0
    %92 = vmatprep.subr.mxu0 0.0
    %93 = vmatpush1.xpose.msra.mxu0 0.0
    %94 = vmatprep.subr.mxu0 0.0
    %95 = vmatpush1.xpose.msra.mxu0 0.0
    %96 = vmatprep.subr.mxu0 0.0
    %97 = vmatpush1.xpose.msra.mxu0 0.0
    %98 = vmatprep.subr.mxu0 0.0
    %99 = vmatpush1.xpose.msra.mxu0 0.0
    %100 = vmatprep.subr.mxu0 0.0
    %101 = vmatpush1.xpose.msra.mxu0 0.0
    %102 = vmatprep.subr.mxu0 0.0
    %103 = vmatpush1.xpose.msra.mxu0 0.0
    %104 = vmatprep.subr.mxu0 0.0
    %105 = vmatpush1.xpose.msra.mxu0 0.0
    %106 = vmatprep.subr.mxu0 0.0
    %107 = vmatpush1.xpose.msra.mxu0 0.0
    %108 = vmatprep.subr.mxu0 0.0
    %109 = vmatpush1.xpose.msra.mxu0 0.0
    %110 = vmatprep.subr.mxu0 0.0
    %111 = vmatpush1.xpose.msra.mxu0 0.0
    %112 = vmatprep.mubr.f32.mxu0 0.0
    %113 = vmatmul.mubr.f32.gmra.mrb[0].mxu0 %v43
    %v114 = vpop.f32.mrb[0].mxu0
    %v115 = vadd.f32 0.0, %v114
    %v116 = vpop.f32.mrb[0].mxu0
    %117 = vdwg.mxu0
    %vm118 = vcmask 57344
    %v119 = vsel %vm118, %v115, -inf
    %120 = vmax.xlane.f32.xlu0 %v119
    %v121 = vpop.xlane.xlu0 %120
    %v122 = vsub.f32 %v115, %v121
    %v123 = vmul.f32 %v122, 1.442695
    %v124 = vpow.pop %v123
    %v125 = vsel %vm118, %v124, 0.0
    %126 = vadd.xlane.f32.xlu0 %v125
    %v127 = vpop.xlane.xlu0 %126
    %v128 = vrcp.pop %v127
    %v129 = vmul.f32 %v124, %v128
    %130 = vst.msk [vmem:[#allocation7] sm:$0x1] %vm118, %v129
    %vm131 = vcmask 64512
    %v133 = vsel %vm131, %v129, 0
    %135 = vmatprep.subr.mxu0 0.0
    %136 = vmatpush1.msra.mxu0 %v40
    %137 = vmatprep.subr.mxu0 0.0
    %138 = vmatpush1.msra.mxu0 0.0
    %139 = vmatprep.subr.mxu0 0.0
    %140 = vmatpush1.msra.mxu0 0.0
    %141 = vmatprep.subr.mxu0 0.0
    %142 = vmatpush1.msra.mxu0 0.0
    %143 = vmatprep.subr.mxu0 0.0
    %144 = vmatpush1.msra.mxu0 0.0
    %145 = vmatprep.subr.mxu0 0.0
    %146 = vmatpush1.msra.mxu0 0.0
    %147 = vmatprep.subr.mxu0 0.0
    %148 = vmatpush1.msra.mxu0 0.0
    %149 = vmatprep.subr.mxu0 0.0
    %150 = vmatpush1.msra.mxu0 0.0
    %151 = vmatprep.subr.mxu0 0.0
    %152 = vmatpush1.msra.mxu0 0.0
    %153 = vmatprep.subr.mxu0 0.0
    %154 = vmatpush1.msra.mxu0 0.0
    %155 = vmatprep.subr.mxu0 0.0
    %156 = vmatpush1.msra.mxu0 0.0
    %157 = vmatprep.subr.mxu0 0.0
    %158 = vmatpush1.msra.mxu0 0.0
    %159 = vmatprep.subr.mxu0 0.0
    %160 = vmatpush1.msra.mxu0 0.0
    %161 = vmatprep.subr.mxu0 0.0
    %162 = vmatpush1.msra.mxu0 0.0
    %163 = vmatprep.subr.mxu0 0.0
    %164 = vmatpush1.msra.mxu0 0.0
    %165 = vmatprep.subr.mxu0 0.0
    %166 = vmatpush1.msra.mxu0 0.0
    %167 = vmatprep.subr.mxu0 0.0
    %168 = vmatpush1.msra.mxu0 0.0
    %169 = vmatprep.subr.mxu0 0.0
    %170 = vmatpush1.msra.mxu0 0.0
    %171 = vmatprep.subr.mxu0 0.0
    %172 = vmatpush1.msra.mxu0 0.0
    %173 = vmatprep.subr.mxu0 0.0
    %174 = vmatpush1.msra.mxu0 0.0
    %175 = vmatprep.subr.mxu0 0.0
    %176 = vmatpush1.msra.mxu0 0.0
    %177 = vmatprep.subr.mxu0 0.0
    %178 = vmatpush1.msra.mxu0 0.0
    %179 = vmatprep.subr.mxu0 0.0
    %180 = vmatpush1.msra.mxu0 0.0
    %181 = vmatprep.subr.mxu0 0.0
    %182 = vmatpush1.msra.mxu0 0.0
    %183 = vmatprep.subr.mxu0 0.0
    %184 = vmatpush1.msra.mxu0 0.0
    %185 = vmatprep.subr.mxu0 0.0
    %186 = vmatpush1.msra.mxu0 0.0
    %187 = vmatprep.subr.mxu0 0.0
    %188 = vmatpush1.msra.mxu0 0.0
    %189 = vmatprep.subr.mxu0 0.0
    %190 = vmatpush1.msra.mxu0 0.0
    %191 = vmatprep.subr.mxu0 0.0
    %192 = vmatpush1.msra.mxu0 0.0
    %193 = vmatprep.subr.mxu0 0.0
    %194 = vmatpush1.msra.mxu0 0.0
    %195 = vmatprep.subr.mxu0 0.0
    %196 = vmatpush1.msra.mxu0 0.0
    %197 = vmatprep.subr.mxu0 0.0
    %198 = vmatpush1.msra.mxu0 0.0
    %199 = vmatprep.mubr.f32.mxu0 0.0
    %200 = vmatmul.mubr.f32.gmra.mrb[0].mxu0 %v133
    %v201 = vpop.f32.mrb[0].mxu0
    %v202 = vadd.f32 0.0, %v201
    %v203 = vpop.f32.mrb[0].mxu0
    %204 = vdwg.mxu0
    %vm205 = vcmask 253952
    %206 = vst.msk [vmem:[#allocation8] sm:$0x1] %vm205, %v202
    // Predicated region
    $region18: #{tpu_custom_call.1} parent=1 // pred_check
      _
    $region19: #{tpu_custom_call.1} parent=1 // pred_check_branch
      %208 = sbr.rel (0) target = $region21
    $region20: #{tpu_custom_call.1} parent=1 // pred_region
      %s210 = ssub.s32 16, 16
      %211 = vsyncadd [#allocation4], %s210
      %s213 = sshll.u32 [#allocation7], 4
      %s214 = int_to_ptr.vmem [resolvable:$true] %s213
      %216 = dma.vmem_to_hbm [thread:$0]  %s214, 16, %s2, [#allocation4]
    $region21: #{tpu_custom_call.1} parent=1 // pred_fallthru
      _
    // Predicated region
    $region22: #{tpu_custom_call.1} parent=1 // pred_check
      _
    $region23: #{tpu_custom_call.1} parent=1 // pred_check_branch
      %218 = sbr.rel (0) target = $region25
    $region24: #{tpu_custom_call.1} parent=1 // pred_region
      %s220 = ssub.s32 16, 16
      %221 = vsyncadd [#allocation9], %s220
      %s223 = sshll.u32 [#allocation8], 4
      %s224 = int_to_ptr.vmem [resolvable:$true] %s223
      %226 = dma.vmem_to_hbm [thread:$0]  %s224, 16, %s3, [#allocation9]
    $region25: #{tpu_custom_call.1} parent=1 // pred_fallthru
      _
    // Predicated region
    $region26: #{tpu_custom_call.1} parent=1 // pred_check
      _
    $region27: #{tpu_custom_call.1} parent=1 // pred_check_branch
      %228 = sbr.rel (0) target = $region29
    $region28: #{tpu_custom_call.1} parent=1 // pred_region
      %229 = dma.done [#allocation4], 16
    $region29: #{tpu_custom_call.1} parent=1 // pred_fallthru
      _
    // Predicated region
    $region30: #{tpu_custom_call.1} parent=1 // pred_check
      _
    $region31: #{tpu_custom_call.1} parent=1 // pred_check_branch
      %231 = sbr.rel (0) target = $region33
    $region32: #{tpu_custom_call.1} parent=1 // pred_region
      %232 = dma.done [#allocation9], 16
    $region33: #{tpu_custom_call.1} parent=1 // pred_fallthru
      _
    %233 = vsyncpa [#allocation3], 1
    %234 = vsyncpa [#allocation6], 1
    %235 = vsyncpa [#allocation4], 1
    %236 = vsyncpa [#allocation9], 1

</llo_original>
